<compile_context>
chip_gen: v5e
topology: v5e:2x2
jax: 0.10.0
libtpu: 0.0.40
codegen_flags: <defaults>
</compile_context>

<pallas_src>
import functools

import jax
import jax.numpy as jnp
from jax import lax
from jax.experimental import pallas as pl
from jax.experimental.pallas import tpu as pltpu


LN_EPS = 1e-5  # torch.nn.LayerNorm default


def _round_up(x, m):
    return -(-x // m) * m


def _layernorm(h, gamma, beta):
    # h: (TB, F) f32, gamma/beta: (1, F)
    mean = jnp.mean(h, axis=-1, keepdims=True)
    cent = h - mean
    var = jnp.mean(cent * cent, axis=-1, keepdims=True)
    inv = lax.rsqrt(var + LN_EPS)
    return cent * inv * gamma + beta


def value_mlp_kernel(x_ref, w1_ref, c1_ref, w2_ref, c2_ref, c3_ref, o_ref):
    """c1/c2 rows: [bias, gamma, beta, 0...].  c3 rows: [w3_row, b3@[1,0], 0...]."""
    x = x_ref[...].astype(jnp.float32)
    c1 = c1_ref[...]
    c2 = c2_ref[...]
    c3 = c3_ref[...]

    # Layer 1: Linear -> ReLU -> LayerNorm  (MXU + VPU)
    h = jnp.dot(x, w1_ref[...], preferred_element_type=jnp.float32) + c1[0:1, :]
    h = jnp.maximum(h, 0.0)
    h = _layernorm(h, c1[1:2, :], c1[2:3, :])

    # Layer 2: Linear -> ReLU -> LayerNorm
    h = jnp.dot(h, w2_ref[...], preferred_element_type=jnp.float32) + c2[0:1, :]
    h = jnp.maximum(h, 0.0)
    h = _layernorm(h, c2[1:2, :], c2[2:3, :])

    # Head (out_features == 1): VPU multiply + XLU transpose/sublane-reduce
    # instead of an N=1 MXU matmul; result lands lane-dense as (1, TB).
    w3_row = c3[0:1, :]                      # (1, H2)
    b3 = c3[1:2, 0:1]                        # (1, 1)
    prod = h * w3_row                        # (TB, H2)   VPU
    v = jnp.sum(jnp.transpose(prod), axis=0, keepdims=True) + b3   # (1, TB)
    o_ref[...] = v.astype(o_ref.dtype)


@functools.partial(jax.jit, static_argnames=("block_b",))
def value_forward(x, packed_params, block_b=1024):
    """x: (B, num_states) f32.  packed_params from pack_params().  Returns (B, 1)."""
    w1, c1, w2, c2, c3 = packed_params
    B, S = x.shape
    H1 = w1.shape[1]
    H2 = w2.shape[1]

    # Batch tile: as large as possible (<= block_b), multiple of 8 for f32
    # sublanes; if more than one grid step is needed, the lane-dense output
    # tile must also be a multiple of 128 lanes.
    tb = max(8, min(block_b, _round_up(B, 8)))
    tb = _round_up(tb, 8)
    if tb < B:
        tb = _round_up(tb, 128)
    Bp = _round_up(B, tb)
    if Bp != B:
        x = jnp.pad(x, ((0, Bp - B), (0, 0)))

    full = lambda shape: pl.BlockSpec(shape, lambda i: (0, 0))

    out = pl.pallas_call(
        value_mlp_kernel,
        out_shape=jax.ShapeDtypeStruct((1, Bp), jnp.float32),
        grid=(Bp // tb,),
        in_specs=[
            pl.BlockSpec((tb, S), lambda i: (i, 0)),   # x batch tile
            full((S, H1)),    # w1
            full((8, H1)),    # c1 = [b1; g1; beta1; pad]
            full((H1, H2)),   # w2
            full((8, H2)),    # c2 = [b2; g2; beta2; pad]
            full((8, H2)),    # c3 = [w3 row; b3; pad]
        ],
        out_specs=pl.BlockSpec((1, tb), lambda i: (0, i)),  # lane-dense values
        compiler_params=pltpu.CompilerParams(
            dimension_semantics=("parallel",)),
    )(x, w1, c1, w2, c2, c3)

    return out[0, :B][:, None]   # (B, 1)


def init_params(key, num_states, num_hiddens=(64, 64)):
    """Deterministic synthetic init (shapes match nn.Linear/LayerNorm)."""
    dims = [num_states, *num_hiddens, 1]
    keys = jax.random.split(key, 2 * (len(dims) - 1))
    params = []
    for idx in range(len(dims) - 1):
        n_in, n_out = dims[idx], dims[idx + 1]
        kw, kb = keys[2 * idx], keys[2 * idx + 1]
        bound = 1.0 / jnp.sqrt(n_in)
        w = jax.random.uniform(kw, (n_in, n_out), jnp.float32, -bound, bound)
        b = jax.random.uniform(kb, (1, n_out), jnp.float32, -bound, bound)
        params.extend([w, b])
        if idx != len(dims) - 2:  # LayerNorm after every non-final layer
            params.extend([jnp.ones((1, n_out), jnp.float32),   # gamma
                           jnp.zeros((1, n_out), jnp.float32)])  # beta
    return tuple(params)


def pack_params(params):
    """(w1,b1,g1,be1,w2,b2,g2,be2,w3,b3) -> (w1, c1, w2, c2, c3) kernel layout."""
    (w1, b1, g1, be1, w2, b2, g2, be2, w3, b3) = params

    def pack_rows(rows, width):
        c = jnp.zeros((8, width), jnp.float32)
        for r, v in enumerate(rows):
            c = c.at[r, :].set(v.reshape(-1))
        return c

    H1 = w1.shape[1]
    H2 = w2.shape[1]
    c1 = pack_rows([b1, g1, be1], H1)
    c2 = pack_rows([b2, g2, be2], H2)
    c3 = jnp.zeros((8, H2), jnp.float32)
    c3 = c3.at[0, :].set(w3.reshape(-1))      # head weight as a lane row
    c3 = c3.at[1, 0].set(b3[0, 0])            # head bias scalar
    return (w1, c1, w2, c2, c3)


def value_ref(x, params):
    """Pure-JAX reference of the same forward pass (unpacked params)."""
    (w1, b1, g1, be1, w2, b2, g2, be2, w3, b3) = params

    def ln(h, g, b):
        m = jnp.mean(h, -1, keepdims=True)
        v = jnp.mean((h - m) ** 2, -1, keepdims=True)
        return (h - m) / jnp.sqrt(v + LN_EPS) * g + b

    h = ln(jnp.maximum(x @ w1 + b1, 0.0), g1, be1)
    h = ln(jnp.maximum(h @ w2 + b2, 0.0), g2, be2)
    return h @ w3 + b3


if __name__ == "__main__":
    key = jax.random.PRNGKey(0)
    k_params, k_x = jax.random.split(key)

    num_states = 32
    batch = 8

    params = init_params(k_params, num_states, num_hiddens=(64, 64))
    packed = pack_params(params)

    # forward(*args) concatenates on the last dim; emulate two state chunks.
    x_a = jax.random.normal(k_x, (batch, num_states // 2), jnp.float32)
    x_b = jax.random.normal(jax.random.fold_in(k_x, 1),
                            (batch, num_states // 2), jnp.float32)
    x = jnp.concatenate([x_a, x_b], axis=-1)  # torch.cat(args, -1) (plain JAX glue)

    out = value_forward(x, packed)
    out = jax.block_until_ready(out)
    ref = value_ref(x, params)
    assert out.shape == (batch, 1)
    assert jnp.allclose(out, ref, atol=1e-4, rtol=1e-4)

    # Second check: non-multiple batch + multi-step grid (padding + lane tiling).
    x2 = jax.random.normal(jax.random.fold_in(k_x, 2), (200, num_states), jnp.float32)
    out2 = jax.block_until_ready(value_forward(x2, packed, block_b=128))
    ref2 = value_ref(x2, params)
    assert out2.shape == (200, 1)
    assert jnp.allclose(out2, ref2, atol=1e-4, rtol=1e-4)

    print("KERNEL_OK")
</pallas_src>

<mosaic_0001>
module attributes {stable_mosaic.version = 11 : i64} {
  func.func @value_mlp_kernel(%arg0: i32, %arg1: memref<8x32xf32, #tpu.memory_space<vmem>>, %arg2: memref<32x64xf32, #tpu.memory_space<vmem>>, %arg3: memref<8x64xf32, #tpu.memory_space<vmem>>, %arg4: memref<64x64xf32, #tpu.memory_space<vmem>>, %arg5: memref<8x64xf32, #tpu.memory_space<vmem>>, %arg6: memref<8x64xf32, #tpu.memory_space<vmem>>, %arg7: memref<1x8xf32, #tpu.memory_space<vmem>>) attributes {dimension_semantics = [#tpu.dimension_semantics<parallel>], iteration_bounds = array<i64: 1>, scalar_prefetch = 0 : i64, scratch_operands = 0 : i64, tpu.core_type = #tpu.core_type<tc>, window_params = [{transform_indices = @transform_0, window_bounds = array<i64: 8, 32>}, {pipeline_mode = #tpu.pipeline_mode<synchronous>, transform_indices = @transform_1, window_bounds = array<i64: 32, 64>}, {pipeline_mode = #tpu.pipeline_mode<synchronous>, transform_indices = @transform_2, window_bounds = array<i64: 8, 64>}, {pipeline_mode = #tpu.pipeline_mode<synchronous>, transform_indices = @transform_3, window_bounds = array<i64: 64, 64>}, {pipeline_mode = #tpu.pipeline_mode<synchronous>, transform_indices = @transform_4, window_bounds = array<i64: 8, 64>}, {pipeline_mode = #tpu.pipeline_mode<synchronous>, transform_indices = @transform_5, window_bounds = array<i64: 8, 64>}, {transform_indices = @transform_6, window_bounds = array<i64: 1, 8>}]} {
    %c0 = arith.constant 0 : index
    %c0_0 = arith.constant 0 : index
    %0 = vector.load %arg1[%c0, %c0_0] : memref<8x32xf32, #tpu.memory_space<vmem>>, vector<8x32xf32>
    %c0_1 = arith.constant 0 : index
    %c0_2 = arith.constant 0 : index
    %1 = vector.load %arg3[%c0_1, %c0_2] : memref<8x64xf32, #tpu.memory_space<vmem>>, vector<8x64xf32>
    %c0_3 = arith.constant 0 : index
    %c0_4 = arith.constant 0 : index
    %2 = vector.load %arg5[%c0_3, %c0_4] : memref<8x64xf32, #tpu.memory_space<vmem>>, vector<8x64xf32>
    %c0_5 = arith.constant 0 : index
    %c0_6 = arith.constant 0 : index
    %3 = vector.load %arg6[%c0_5, %c0_6] : memref<8x64xf32, #tpu.memory_space<vmem>>, vector<8x64xf32>
    %c0_7 = arith.constant 0 : index
    %c0_8 = arith.constant 0 : index
    %4 = vector.load %arg2[%c0_7, %c0_8] : memref<32x64xf32, #tpu.memory_space<vmem>>, vector<32x64xf32>
    %cst = arith.constant dense<0.000000e+00> : vector<8x64xf32>
    %5 = tpu.matmul %0, %4, %cst {dimension_numbers = #tpu.dot_dimension_numbers<[1], [0], [0], [1], [0, 0, 1, 1], [], []>} : vector<8x32xf32>, vector<32x64xf32>, vector<8x64xf32> -> vector<8x64xf32>
    %6 = vector.extract_strided_slice %1 {offsets = [0, 0], sizes = [1, 64], strides = [1, 1]} : vector<8x64xf32> to vector<1x64xf32>
    %7 = vector.broadcast %6 : vector<1x64xf32> to vector<8x64xf32>
    %8 = arith.addf %5, %7 : vector<8x64xf32>
    %cst_9 = arith.constant 0.000000e+00 : f32
    %9 = vector.broadcast %cst_9 : f32 to vector<8x64xf32>
    %10 = arith.maximumf %8, %9 : vector<8x64xf32>
    %11 = vector.extract_strided_slice %1 {offsets = [1, 0], sizes = [1, 64], strides = [1, 1]} : vector<8x64xf32> to vector<1x64xf32>
    %12 = vector.extract_strided_slice %1 {offsets = [2, 0], sizes = [1, 64], strides = [1, 1]} : vector<8x64xf32> to vector<1x64xf32>
    %cst_10 = arith.constant dense<0.000000e+00> : vector<8xf32>
    %13 = vector.multi_reduction <add>, %10, %cst_10 [1] : vector<8x64xf32> to vector<8xf32>
    %14 = vector.shape_cast %13 : vector<8xf32> to vector<8x1xf32>
    %cst_11 = arith.constant 6.400000e+01 : f32
    %15 = vector.broadcast %cst_11 : f32 to vector<8x1xf32>
    %16 = arith.divf %14, %15 : vector<8x1xf32>
    %17 = vector.broadcast %16 : vector<8x1xf32> to vector<8x64xf32>
    %18 = arith.subf %10, %17 : vector<8x64xf32>
    %19 = arith.mulf %18, %18 : vector<8x64xf32>
    %cst_12 = arith.constant dense<0.000000e+00> : vector<8xf32>
    %20 = vector.multi_reduction <add>, %19, %cst_12 [1] : vector<8x64xf32> to vector<8xf32>
    %21 = vector.shape_cast %20 : vector<8xf32> to vector<8x1xf32>
    %cst_13 = arith.constant 6.400000e+01 : f32
    %22 = vector.broadcast %cst_13 : f32 to vector<8x1xf32>
    %23 = arith.divf %21, %22 : vector<8x1xf32>
    %cst_14 = arith.constant 9.99999974E-6 : f32
    %24 = vector.broadcast %cst_14 : f32 to vector<8x1xf32>
    %25 = arith.addf %23, %24 : vector<8x1xf32>
    %26 = math.rsqrt %25 : vector<8x1xf32>
    %27 = vector.broadcast %26 : vector<8x1xf32> to vector<8x64xf32>
    %28 = arith.mulf %18, %27 : vector<8x64xf32>
    %29 = vector.broadcast %11 : vector<1x64xf32> to vector<8x64xf32>
    %30 = arith.mulf %28, %29 : vector<8x64xf32>
    %31 = vector.broadcast %12 : vector<1x64xf32> to vector<8x64xf32>
    %32 = arith.addf %30, %31 : vector<8x64xf32>
    %c0_15 = arith.constant 0 : index
    %c0_16 = arith.constant 0 : index
    %33 = vector.load %arg4[%c0_15, %c0_16] : memref<64x64xf32, #tpu.memory_space<vmem>>, vector<64x64xf32>
    %cst_17 = arith.constant dense<0.000000e+00> : vector<8x64xf32>
    %34 = tpu.matmul %32, %33, %cst_17 {dimension_numbers = #tpu.dot_dimension_numbers<[1], [0], [0], [1], [0, 0, 1, 1], [], []>} : vector<8x64xf32>, vector<64x64xf32>, vector<8x64xf32> -> vector<8x64xf32>
    %35 = vector.extract_strided_slice %2 {offsets = [0, 0], sizes = [1, 64], strides = [1, 1]} : vector<8x64xf32> to vector<1x64xf32>
    %36 = vector.broadcast %35 : vector<1x64xf32> to vector<8x64xf32>
    %37 = arith.addf %34, %36 : vector<8x64xf32>
    %cst_18 = arith.constant 0.000000e+00 : f32
    %38 = vector.broadcast %cst_18 : f32 to vector<8x64xf32>
    %39 = arith.maximumf %37, %38 : vector<8x64xf32>
    %40 = vector.extract_strided_slice %2 {offsets = [1, 0], sizes = [1, 64], strides = [1, 1]} : vector<8x64xf32> to vector<1x64xf32>
    %41 = vector.extract_strided_slice %2 {offsets = [2, 0], sizes = [1, 64], strides = [1, 1]} : vector<8x64xf32> to vector<1x64xf32>
    %cst_19 = arith.constant dense<0.000000e+00> : vector<8xf32>
    %42 = vector.multi_reduction <add>, %39, %cst_19 [1] : vector<8x64xf32> to vector<8xf32>
    %43 = vector.shape_cast %42 : vector<8xf32> to vector<8x1xf32>
    %cst_20 = arith.constant 6.400000e+01 : f32
    %44 = vector.broadcast %cst_20 : f32 to vector<8x1xf32>
    %45 = arith.divf %43, %44 : vector<8x1xf32>
    %46 = vector.broadcast %45 : vector<8x1xf32> to vector<8x64xf32>
    %47 = arith.subf %39, %46 : vector<8x64xf32>
    %48 = arith.mulf %47, %47 : vector<8x64xf32>
    %cst_21 = arith.constant dense<0.000000e+00> : vector<8xf32>
    %49 = vector.multi_reduction <add>, %48, %cst_21 [1] : vector<8x64xf32> to vector<8xf32>
    %50 = vector.shape_cast %49 : vector<8xf32> to vector<8x1xf32>
    %cst_22 = arith.constant 6.400000e+01 : f32
    %51 = vector.broadcast %cst_22 : f32 to vector<8x1xf32>
    %52 = arith.divf %50, %51 : vector<8x1xf32>
    %cst_23 = arith.constant 9.99999974E-6 : f32
    %53 = vector.broadcast %cst_23 : f32 to vector<8x1xf32>
    %54 = arith.addf %52, %53 : vector<8x1xf32>
    %55 = math.rsqrt %54 : vector<8x1xf32>
    %56 = vector.broadcast %55 : vector<8x1xf32> to vector<8x64xf32>
    %57 = arith.mulf %47, %56 : vector<8x64xf32>
    %58 = vector.broadcast %40 : vector<1x64xf32> to vector<8x64xf32>
    %59 = arith.mulf %57, %58 : vector<8x64xf32>
    %60 = vector.broadcast %41 : vector<1x64xf32> to vector<8x64xf32>
    %61 = arith.addf %59, %60 : vector<8x64xf32>
    %62 = vector.extract_strided_slice %3 {offsets = [0, 0], sizes = [1, 64], strides = [1, 1]} : vector<8x64xf32> to vector<1x64xf32>
    %63 = vector.extract_strided_slice %3 {offsets = [1, 0], sizes = [1, 1], strides = [1, 1]} : vector<8x64xf32> to vector<1x1xf32>
    %64 = vector.broadcast %62 : vector<1x64xf32> to vector<8x64xf32>
    %65 = arith.mulf %61, %64 : vector<8x64xf32>
    %66 = tpu.transpose %65, [1, 0] : vector<8x64xf32> -> vector<64x8xf32>
    %cst_24 = arith.constant dense<0.000000e+00> : vector<8xf32>
    %67 = vector.multi_reduction <add>, %66, %cst_24 [0] : vector<64x8xf32> to vector<8xf32>
    %68 = vector.shape_cast %67 : vector<8xf32> to vector<1x8xf32>
    %69 = vector.broadcast %63 : vector<1x1xf32> to vector<1x8xf32>
    %70 = arith.addf %68, %69 : vector<1x8xf32>
    %c0_25 = arith.constant 0 : index
    %c0_26 = arith.constant 0 : index
    %71 = vector.load %arg7[%c0_25, %c0_26] : memref<1x8xf32, #tpu.memory_space<vmem>>, vector<1x8xf32>
    tpu.vector_store %arg7[%c0_25, %c0_26], %70 {strides = array<i32>} : memref<1x8xf32, #tpu.memory_space<vmem>>, vector<1x8xf32>,
    return
  }
  func.func @transform_0(%arg0: i32) -> (i32, i32) {
    %c0_i32 = arith.constant 0 : i32
    %c0_i32_0 = arith.constant 0 : i32
    return %arg0, %c0_i32 : i32, i32
  }
  func.func @transform_1(%arg0: i32) -> (i32, i32) {
    %c0_i32 = arith.constant 0 : i32
    %c0_i32_0 = arith.constant 0 : i32
    %c0_i32_1 = arith.constant 0 : i32
    return %c0_i32, %c0_i32_0 : i32, i32
  }
  func.func @transform_2(%arg0: i32) -> (i32, i32) {
    %c0_i32 = arith.constant 0 : i32
    %c0_i32_0 = arith.constant 0 : i32
    %c0_i32_1 = arith.constant 0 : i32
    return %c0_i32, %c0_i32_0 : i32, i32
  }
  func.func @transform_3(%arg0: i32) -> (i32, i32) {
    %c0_i32 = arith.constant 0 : i32
    %c0_i32_0 = arith.constant 0 : i32
    %c0_i32_1 = arith.constant 0 : i32
    return %c0_i32, %c0_i32_0 : i32, i32
  }
  func.func @transform_4(%arg0: i32) -> (i32, i32) {
    %c0_i32 = arith.constant 0 : i32
    %c0_i32_0 = arith.constant 0 : i32
    %c0_i32_1 = arith.constant 0 : i32
    return %c0_i32, %c0_i32_0 : i32, i32
  }
  func.func @transform_5(%arg0: i32) -> (i32, i32) {
    %c0_i32 = arith.constant 0 : i32
    %c0_i32_0 = arith.constant 0 : i32
    %c0_i32_1 = arith.constant 0 : i32
    return %c0_i32, %c0_i32_0 : i32, i32
  }
  func.func @transform_6(%arg0: i32) -> (i32, i32) {
    %c0_i32 = arith.constant 0 : i32
    %c0_i32_0 = arith.constant 0 : i32
    return %c0_i32, %arg0 : i32, i32
  }
}

</mosaic_0001>

<llo_original>
// kernel: value_forward.1
$region0: #{value_forward.1}
  #allocation0 [shape = 'u32[]', space=smem, size = 0x4, offset = 0x4, fixed_abs, tag = 'smem constant byte address 0x4 - core index']
  #allocation1 [shape = 'u32[72,128]{1,0:T(1,128)}', space=vmem, size = 0x9000, scoped, tag = 'internal scratch']
  %s0 = inlined_call_operand.hbm [shape: f32[8,32], index: 0, kind: input, shape index: {}]
  %s1 = inlined_call_operand.hbm [shape: f32[32,64], index: 1, kind: input, shape index: {}]
  %s2 = inlined_call_operand.hbm [shape: f32[8,64], index: 2, kind: input, shape index: {}]
  %s3 = inlined_call_operand.hbm [shape: f32[64,64], index: 3, kind: input, shape index: {}]
  %s4 = inlined_call_operand.hbm [shape: f32[8,64], index: 4, kind: input, shape index: {}]
  %s5 = inlined_call_operand.hbm [shape: f32[8,64], index: 5, kind: input, shape index: {}]
  %s6 = inlined_call_operand.hbm [shape: f32[1,8], index: 6, kind: output, shape index: {}]
  %s7 = sld [smem:[#allocation0]]
  $region58: #{value_forward.1} parent=0
    _
  %s9 = ssub.s32 1, %s7
  %s10 = scalar_select 0, %s9, %s7
  $region1: #{value_forward.1} parent=0
    #allocation2 [shape = 'u8[4096]{0}', space=vmem, size = 0x1000, scoped, tag = 'input window, operand 0, single buffered']
    #allocation3 [shape = 's32[1]{0}', space=sflag, size = 0x4, scoped, tag = 'scoped memory for value_forward.1']
    #allocation4 [shape = 's32[1]{0}', space=sflag, size = 0x4, scoped, tag = 'scoped memory for value_forward.1']
    #allocation5 [shape = 'u8[16384]{0}', space=vmem, size = 0x4000, scoped, tag = 'input window, operand 1, single buffered']
    #allocation6 [shape = 's32[1]{0}', space=sflag, size = 0x4, scoped, tag = 'scoped memory for value_forward.1']
    #allocation7 [shape = 'u8[4096]{0}', space=vmem, size = 0x1000, scoped, tag = 'input window, operand 2, single buffered']
    #allocation8 [shape = 'u8[32768]{0}', space=vmem, size = 0x8000, scoped, tag = 'input window, operand 3, single buffered']
    #allocation9 [shape = 's32[1]{0}', space=sflag, size = 0x4, scoped, tag = 'scoped memory for value_forward.1']
    #allocation10 [shape = 'u8[4096]{0}', space=vmem, size = 0x1000, scoped, tag = 'input window, operand 4, single buffered']
    #allocation11 [shape = 'u8[4096]{0}', space=vmem, size = 0x1000, scoped, tag = 'input window, operand 5, single buffered']
    #allocation12 [shape = 's32[1]{0}', space=sflag, size = 0x4, scoped, tag = 'scoped memory for value_forward.1']
    #allocation13 [shape = 'u8[512]{0}', space=vmem, size = 0x400, scoped, tag = 'output window, operand 0, single buffered']
    %11 = vsyncpa [#allocation3], 0
    %12 = vsyncpa [#allocation6], 0
    %13 = vsyncpa [#allocation9], 0
    %14 = vsyncpa [#allocation12], 0
    %15 = vsyncpa [#allocation4], 0
    // Predicated region
    $region2: #{value_forward.1} parent=1 // pred_check
      _
    $region3: #{value_forward.1} parent=1 // pred_check_branch
      %17 = sbr.rel (0) target = $region5
    $region4: #{value_forward.1} parent=1 // pred_region
      %19 = vsyncadd [#allocation3], 0
      %s21 = sshll.u32 %s0, 4
      %s22 = int_to_ptr.hbm [resolvable:$true] %s21
      %s23 = sshll.u32 [#allocation2], 4
      %s24 = int_to_ptr.vmem [resolvable:$true] %s23
      %26 = dma.hbm_to_vmem [thread:$0]  %s22, 128, %s24, [#allocation3]
    $region5: #{value_forward.1} parent=1 // pred_fallthru
      _
    // Predicated region
    $region6: #{value_forward.1} parent=1 // pred_check
      _
    $region7: #{value_forward.1} parent=1 // pred_check_branch
      %28 = sbr.rel (0) target = $region9
    $region8: #{value_forward.1} parent=1 // pred_region
      %30 = vsyncadd [#allocation6], 0
      %s31 = sshll.u32 %s1, 4
      %s32 = int_to_ptr.hbm [resolvable:$true] %s31
      %s33 = sshll.u32 [#allocation5], 4
      %s34 = int_to_ptr.vmem [resolvable:$true] %s33
      %39 = dma.hbm_to_vmem [thread:$0]  %s32, 512, %s34, [#allocation6], 128, 128, 8
    $region9: #{value_forward.1} parent=1 // pred_fallthru
      _
    // Predicated region
    $region10: #{value_forward.1} parent=1 // pred_check
      _
    $region11: #{value_forward.1} parent=1 // pred_check_branch
      %41 = sbr.rel (0) target = $region13
    $region12: #{value_forward.1} parent=1 // pred_region
      %43 = vsyncadd [#allocation6], 0
      %s45 = sshll.u32 %s2, 4
      %s46 = int_to_ptr.hbm [resolvable:$true] %s45
      %s47 = sshll.u32 [#allocation7], 4
      %s48 = int_to_ptr.vmem [resolvable:$true] %s47
      %50 = dma.hbm_to_vmem [thread:$0]  %s46, 128, %s48, [#allocation6]
    $region13: #{value_forward.1} parent=1 // pred_fallthru
      _
    // Predicated region
    $region14: #{value_forward.1} parent=1 // pred_check
      _
    $region15: #{value_forward.1} parent=1 // pred_check_branch
      %52 = sbr.rel (0) target = $region17
    $region16: #{value_forward.1} parent=1 // pred_region
      %54 = vsyncadd [#allocation9], 0
      %s55 = sshll.u32 %s3, 4
      %s56 = int_to_ptr.hbm [resolvable:$true] %s55
      %s57 = sshll.u32 [#allocation8], 4
      %s58 = int_to_ptr.vmem [resolvable:$true] %s57
      %63 = dma.hbm_to_vmem [thread:$0]  %s56, 1024, %s58, [#allocation9], 128, 128, 8
    $region17: #{value_forward.1} parent=1 // pred_fallthru
      _
    // Predicated region
    $region18: #{value_forward.1} parent=1 // pred_check
      _
    $region19: #{value_forward.1} parent=1 // pred_check_branch
      %65 = sbr.rel (0) target = $region21
    $region20: #{value_forward.1} parent=1 // pred_region
      %67 = vsyncadd [#allocation9], 0
      %s69 = sshll.u32 %s4, 4
      %s70 = int_to_ptr.hbm [resolvable:$true] %s69
      %s71 = sshll.u32 [#allocation10], 4
      %s72 = int_to_ptr.vmem [resolvable:$true] %s71
      %74 = dma.hbm_to_vmem [thread:$0]  %s70, 128, %s72, [#allocation9]
    $region21: #{value_forward.1} parent=1 // pred_fallthru
      _
    // Predicated region
    $region22: #{value_forward.1} parent=1 // pred_check
      _
    $region23: #{value_forward.1} parent=1 // pred_check_branch
      %76 = sbr.rel (0) target = $region25
    $region24: #{value_forward.1} parent=1 // pred_region
      %78 = vsyncadd [#allocation12], 0
      %s80 = sshll.u32 %s5, 4
      %s81 = int_to_ptr.hbm [resolvable:$true] %s80
      %s82 = sshll.u32 [#allocation11], 4
      %s83 = int_to_ptr.vmem [resolvable:$true] %s82
      %85 = dma.hbm_to_vmem [thread:$0]  %s81, 128, %s83, [#allocation12]
    $region25: #{value_forward.1} parent=1 // pred_fallthru
      _
    // Predicated region
    $region26: #{value_forward.1} parent=1 // pred_check
      _
    $region27: #{value_forward.1} parent=1 // pred_check_branch
      %87 = sbr.rel (0) target = $region29
    $region28: #{value_forward.1} parent=1 // pred_region
      %89 = dma.done [#allocation3], 128
    $region29: #{value_forward.1} parent=1 // pred_fallthru
      _
    // Predicated region
    $region30: #{value_forward.1} parent=1 // pred_check
      _
    $region31: #{value_forward.1} parent=1 // pred_check_branch
      %91 = sbr.rel (0) target = $region33
    $region32: #{value_forward.1} parent=1 // pred_region
      %93 = dma.done [#allocation6], 512
    $region33: #{value_forward.1} parent=1 // pred_fallthru
      _
    // Predicated region
    $region34: #{value_forward.1} parent=1 // pred_check
      _
    $region35: #{value_forward.1} parent=1 // pred_check_branch
      %95 = sbr.rel (0) target = $region37
    $region36: #{value_forward.1} parent=1 // pred_region
      %97 = dma.done [#allocation6], 128
    $region37: #{value_forward.1} parent=1 // pred_fallthru
      _
    // Predicated region
    $region38: #{value_forward.1} parent=1 // pred_check
      _
    $region39: #{value_forward.1} parent=1 // pred_check_branch
      %99 = sbr.rel (0) target = $region41
    $region40: #{value_forward.1} parent=1 // pred_region
      %101 = dma.done [#allocation9], 1024
    $region41: #{value_forward.1} parent=1 // pred_fallthru
      _
    // Predicated region
    $region42: #{value_forward.1} parent=1 // pred_check
      _
    $region43: #{value_forward.1} parent=1 // pred_check_branch
      %103 = sbr.rel (0) target = $region45
    $region44: #{value_forward.1} parent=1 // pred_region
      %105 = dma.done [#allocation9], 128
    $region45: #{value_forward.1} parent=1 // pred_fallthru
      _
    // Predicated region
    $region46: #{value_forward.1} parent=1 // pred_check
      _
    $region47: #{value_forward.1} parent=1 // pred_check_branch
      %107 = sbr.rel (0) target = $region49
    $region48: #{value_forward.1} parent=1 // pred_region
      %109 = dma.done [#allocation12], 128
    $region49: #{value_forward.1} parent=1 // pred_fallthru
      _
    %v110 = vld [vmem:[#allocation2] sm:$0xff]
    %v111 = vld [vmem:[#allocation7] sm:$0xff]
    %v112 = vld [vmem:[#allocation10] sm:$0xff]
    %v113 = vld [vmem:[#allocation11] sm:$0xff]
    %v114 = vld [vmem:[#allocation5] sm:$0xff]
    %v115 = vld [vmem:[#allocation5 + $0x8] sm:$0xff]
    %v116 = vld [vmem:[#allocation5 + $0x10] sm:$0xff]
    %v117 = vld [vmem:[#allocation5 + $0x18] sm:$0xff]
    %v118 = vperm.slane %v111, 0
    %vm119 = vcmask 261120
    %v121 = vsel %vm119, %v110, 0
    %123 = vmatpush.msra.mxu0 0.0
    %124 = vmatpush.msra.mxu0 0.0
    %125 = vmatpush.msra.mxu0 0.0
    %126 = vmatpush.msra.mxu0 0.0
    %127 = vmatpush.msra.mxu0 0.0
    %128 = vmatpush.msra.mxu0 0.0
    %129 = vmatpush.msra.mxu0 0.0
    %130 = vmatpush.msra.mxu0 0.0
    %131 = vmatpush.msra.mxu0 0.0
    %132 = vmatpush.msra.mxu0 0.0
    %133 = vmatpush.msra.mxu0 0.0
    %134 = vmatpush.msra.mxu0 0.0
    %135 = vmatpush.msra.mxu0 %v117
    %136 = vmatpush.msra.mxu0 %v116
    %137 = vmatpush.msra.mxu0 %v115
    %138 = vmatpush.msra.mxu0 %v114
    %139 = vmatmul.f32.gmra.mxu0 %v121
    %v140 = vpop.f32.mrf.mxu0
    %v141 = vadd.f32 %v118, %v140
    %142 = vdwg.mxu0
    %v143 = vmax.f32 %v141, 0.0
    %vm144 = vcmask 523264
    %v145 = vsel %vm144, %v143, 0.0
    %146 = vadd.xlane.f32.xlu0 %v145
    %v147 = vpop.xlane.xlu0 %146
    %v148 = vrcp.pop 64.0
    %v149 = vmul.f32 64.0, %v148
    %v150 = vsub.f32 1.0, %v149
    %v151 = vmul.f32 %v148, %v150
    %v152 = vadd.f32 %v148, %v151
    %vm153 = vweird.f32 %v148
    %v154 = vsel %vm153, %v148, %v152
    %v155 = vmul.f32 %v147, %v154
    %v156 = vsub.f32 %v143, %v155
    %v157 = vmul.f32 %v156, %v156
    %v158 = vsel %vm144, %v157, 0.0
    %159 = vadd.xlane.f32.xlu0 %v158
    %v160 = vpop.xlane.xlu0 %159
    %v161 = vmul.f32 %v160, %v154
    %v162 = vadd.f32 %v161, 1e-05
    %v163 = vrsqrt.pop %v162
    %v164 = vmul.f32 %v163, %v162
    %v165 = vmul.f32 %v164, %v163
    %v166 = vmul.f32 0.5, %v165
    %v167 = vsub.f32 1.5, %v166
    %v168 = vmul.f32 %v163, %v167
    %vm169 = vweird.f32 %v162
    %vm170 = vweird.f32 %v163
    %vm171 = vmor %vm169, %vm170
    %v172 = vsel %vm171, %v163, %v168
    %v173 = vmul.f32 %v156, %v172
    %v174 = vperm.slane %v111, 1
    %v175 = vmul.f32 %v173, %v174
    %v176 = vperm.slane %v111, 2
    %v177 = vadd.f32 %v175, %v176
    %v178 = vld [vmem:[#allocation8] sm:$0xff]
    %v179 = vld [vmem:[#allocation8 + $0x8] sm:$0xff]
    %v180 = vld [vmem:[#allocation8 + $0x10] sm:$0xff]
    %v181 = vld [vmem:[#allocation8 + $0x18] sm:$0xff]
    %v182 = vld [vmem:[#allocation8 + $0x20] sm:$0xff]
    %v183 = vld [vmem:[#allocation8 + $0x28] sm:$0xff]
    %v184 = vld [vmem:[#allocation8 + $0x30] sm:$0xff]
    %v185 = vld [vmem:[#allocation8 + $0x38] sm:$0xff]
    %v186 = vperm.slane %v112, 0
    %v188 = vsel %vm144, %v177, 0
    %190 = vmatpush.msra.mxu0 0.0
    %191 = vmatpush.msra.mxu0 0.0
    %192 = vmatpush.msra.mxu0 0.0
    %193 = vmatpush.msra.mxu0 0.0
    %194 = vmatpush.msra.mxu0 0.0
    %195 = vmatpush.msra.mxu0 0.0
    %196 = vmatpush.msra.mxu0 0.0
    %197 = vmatpush.msra.mxu0 0.0
    %198 = vmatpush.msra.mxu0 %v185
    %199 = vmatpush.msra.mxu0 %v184
    %200 = vmatpush.msra.mxu0 %v183
    %201 = vmatpush.msra.mxu0 %v182
    %202 = vmatpush.msra.mxu0 %v181
    %203 = vmatpush.msra.mxu0 %v180
    %204 = vmatpush.msra.mxu0 %v179
    %205 = vmatpush.msra.mxu0 %v178
    %206 = vmatmul.f32.gmra.mxu0 %v188
    %v207 = vpop.f32.mrf.mxu0
    %v208 = vadd.f32 %v186, %v207
    %209 = vdwg.mxu0
    %v210 = vmax.f32 %v208, 0.0
    %v211 = vsel %vm144, %v210, 0.0
    %212 = vadd.xlane.f32.xlu0 %v211
    %v213 = vpop.xlane.xlu0 %212
    %v214 = vmul.f32 %v213, %v154
    %v215 = vsub.f32 %v210, %v214
    %v216 = vmul.f32 %v215, %v215
    %v217 = vsel %vm144, %v216, 0.0
    %218 = vadd.xlane.f32.xlu0 %v217
    %v219 = vpop.xlane.xlu0 %218
    %v220 = vmul.f32 %v219, %v154
    %v221 = vadd.f32 %v220, 1e-05
    %v222 = vrsqrt.pop %v221
    %v223 = vmul.f32 %v222, %v221
    %v224 = vmul.f32 %v223, %v222
    %v225 = vmul.f32 0.5, %v224
    %v226 = vsub.f32 1.5, %v225
    %v227 = vmul.f32 %v222, %v226
    %vm228 = vweird.f32 %v221
    %vm229 = vweird.f32 %v222
    %vm230 = vmor %vm228, %vm229
    %v231 = vsel %vm230, %v222, %v227
    %v232 = vmul.f32 %v215, %v231
    %v233 = vperm.slane %v112, 1
    %v234 = vmul.f32 %v232, %v233
    %v235 = vperm.slane %v112, 2
    %v236 = vadd.f32 %v234, %v235
    %v237 = vperm.slane %v113, 0
    %v238 = vmul.f32 %v236, %v237
    %239 = vxpose.xlu0.b32.start [1/16] %v238, 128
    %240 = vxpose.xlu0.b32.cont [2/16] 0.0, 128
    %241 = vxpose.xlu0.b32.cont [3/16] 0.0, 128
    %242 = vxpose.xlu0.b32.cont [4/16] 0.0, 128
    %243 = vxpose.xlu0.b32.cont [5/16] 0.0, 128
    %244 = vxpose.xlu0.b32.cont [6/16] 0.0, 128
    %245 = vxpose.xlu0.b32.cont [7/16] 0.0, 128
    %246 = vxpose.xlu0.b32.cont [8/16] 0.0, 128
    %247 = vxpose.xlu0.b32.cont [9/16] 0.0, 128
    %248 = vxpose.xlu0.b32.cont [10/16] 0.0, 128
    %249 = vxpose.xlu0.b32.cont [11/16] 0.0, 128
    %250 = vxpose.xlu0.b32.cont [12/16] 0.0, 128
    %251 = vxpose.xlu0.b32.cont [13/16] 0.0, 128
    %252 = vxpose.xlu0.b32.cont [14/16] 0.0, 128
    %253 = vxpose.xlu0.b32.cont [15/16] 0.0, 128
    %254 = vxpose.xlu0.b32.end [16/16] 0.0, 128
    %v255 = vpop.trf.xlu0
    %v256 = vpop.trf.xlu0
    %v257 = vpop.trf.xlu0
    %v258 = vpop.trf.xlu0
    %v259 = vpop.trf.xlu0
    %v260 = vpop.trf.xlu0
    %v261 = vpop.trf.xlu0
    %v262 = vpop.trf.xlu0
    %v263 = vpop.trf.xlu0
    %v264 = vpop.trf.xlu0
    %v265 = vpop.trf.xlu0
    %v266 = vpop.trf.xlu0
    %v267 = vpop.trf.xlu0
    %v268 = vpop.trf.xlu0
    %v269 = vpop.trf.xlu0
    %v270 = vpop.trf.xlu0
    %vm271 = vcmask 64512
    %v272 = vsel %vm271, %v255, 0.0
    %v273 = vsel %vm271, %v256, 0.0
    %v274 = vadd.f32 %v272, %v273
    %v275 = vsel %vm271, %v257, 0.0
    %v276 = vadd.f32 %v274, %v275
    %v277 = vsel %vm271, %v258, 0.0
    %v278 = vadd.f32 %v276, %v277
    %v279 = vsel %vm271, %v259, 0.0
    %v280 = vadd.f32 %v278, %v279
    %v281 = vsel %vm271, %v260, 0.0
    %v282 = vadd.f32 %v280, %v281
    %v283 = vsel %vm271, %v261, 0.0
    %v284 = vadd.f32 %v282, %v283
    %v285 = vsel %vm271, %v262, 0.0
    %v286 = vadd.f32 %v284, %v285
    %v287 = vrot.slane %v286, 4
    %v288 = vadd.f32 %v286, %v287
    %v289 = vrot.slane %v288, 2
    %v290 = vadd.f32 %v288, %v289
    %v291 = vrot.slane %v290, 1
    %v292 = vadd.f32 %v290, %v291
    %294 = vset.pattern.permute.xlu0 0
    %295 = vperm.xlu0 %294, %v113
    %v296 = vpop.permute.xlu0 %295
    %v298 = vadd.f32 %v292, %v296
    %vm299 = vcmask 58369
    %300 = vst.msk [vmem:[#allocation13 - $0x1] sm:$0x2] %vm299, %v298
    // Predicated region
    $region50: #{value_forward.1} parent=1 // pred_check
      _
    $region51: #{value_forward.1} parent=1 // pred_check_branch
      %302 = sbr.rel (0) target = $region53
    $region52: #{value_forward.1} parent=1 // pred_region
      %304 = vsyncadd [#allocation4], 0
      %s306 = sshll.u32 [#allocation13], 4
      %s307 = int_to_ptr.vmem [resolvable:$true] %s306
      %s308 = sshll.u32 %s6, 4
      %s309 = int_to_ptr.hbm [resolvable:$true] %s308
      %311 = dma.vmem_to_hbm [thread:$0]  %s307, 16, %s309, [#allocation4]
    $region53: #{value_forward.1} parent=1 // pred_fallthru
      _
    // Predicated region
    $region54: #{value_forward.1} parent=1 // pred_check
      _
    $region55: #{value_forward.1} parent=1 // pred_check_branch
      %313 = sbr.rel (0) target = $region57
    $region56: #{value_forward.1} parent=1 // pred_region
      %315 = dma.done [#allocation4], 16
    $region57: #{value_forward.1} parent=1 // pred_fallthru
      _
    %316 = vsyncpa [#allocation3], 1
    %317 = vsyncpa [#allocation6], 1
    %318 = vsyncpa [#allocation9], 1
    %319 = vsyncpa [#allocation12], 1
    %320 = vsyncpa [#allocation4], 1

</llo_original>
